<compile_context>
chip_gen: v6e
topology: v6e:2x2x1
jax: 0.10.0
libtpu: 0.0.40
codegen_flags: <defaults>
</compile_context>

<pallas_src>
import functools

import jax
import jax.numpy as jnp
from jax.experimental import pallas as pl
from jax.experimental.pallas import tpu as pltpu

LN_EPS = 1e-5      # nn.LayerNorm default
_BIG = 3.0e38      # finite +/- "infinity" sentinels for the per-lane clamp


def _round_up(x, m):
    return (x + m - 1) // m * m


def _layernorm(x, gamma, beta):
    # PyTorch LayerNorm over the last dim, biased variance, f32 statistics.
    mean = jnp.mean(x, axis=-1, keepdims=True)
    xc = x - mean
    var = jnp.mean(xc * xc, axis=-1, keepdims=True)
    inv = jax.lax.rsqrt(var + LN_EPS)  # EUP rsqrt — keep it there.
    return xc * inv * gamma + beta


def _policy_kernel(
    state_ref,                     # [TB, Dp]  f32   streamed per grid step
    w1_ref,                        # [Dp, F1]  bf16  resident
    b1_ref, g1_ref, be1_ref,       # [1, F1]   f32   resident
    w2_ref,                        # [F1, F2]  bf16  resident
    b2_ref, g2_ref, be2_ref,       # [1, F2]   f32   resident
    wh_ref,                        # [F2, Hp]  bf16  resident (w_mu | w_ls | 0-pad)
    bh_ref, lo_ref, hi_ref,        # [1, Hp]   f32   resident (bias / clamp bounds)
    out_ref,                       # [TB, Hp]  f32   (mu | clamped log_std | 0-pad)
):
    x = state_ref[...].astype(jnp.bfloat16)

    # fc1 -> LayerNorm -> ReLU  (matmul in bf16, everything else f32)
    h1 = jnp.dot(x, w1_ref[...], preferred_element_type=jnp.float32) + b1_ref[...]
    h1 = _layernorm(h1, g1_ref[...], be1_ref[...])
    h1 = jnp.maximum(h1, 0.0)

    # fc2 -> LayerNorm -> ReLU
    h2 = jnp.dot(h1.astype(jnp.bfloat16), w2_ref[...],
                 preferred_element_type=jnp.float32) + b2_ref[...]
    h2 = _layernorm(h2, g2_ref[...], be2_ref[...])
    h2 = jnp.maximum(h2, 0.0)

    # Fused heads: one lane-dense matmul; per-lane clamp bounds
    # (mu lanes: +/-BIG i.e. unclamped, log_std lanes: [-20, 2], pad lanes: +/-BIG).
    y = jnp.dot(h2.astype(jnp.bfloat16), wh_ref[...],
                preferred_element_type=jnp.float32) + bh_ref[...]
    y = jnp.minimum(jnp.maximum(y, lo_ref[...]), hi_ref[...])

    out_ref[...] = y


def _vmem_need_bytes(TB, Dp, F1, F2, Hp):
    f32, bf16 = 4, 2
    streamed = 2 * TB * Dp * f32 + 2 * TB * Hp * f32                 # dbl-buffered in/out
    resident = 2 * ((Dp * F1 + F1 * F2 + F2 * Hp) * bf16             # bf16 weights
                    + 3 * (F1 + F2 + Hp) * f32)                      # biases / LN / bounds
    live = TB * (F1 + F2 + Hp) * f32 + TB * (Dp + F1 + F2) * bf16    # activations + casts
    return streamed + resident + live


@functools.partial(jax.jit, static_argnames=("block_b",))
def policy_forward(state, params, block_b=1024):
    """state: [B, input_dims] f32 -> (mu [B, n_actions], log_std [B, n_actions])."""
    B, D_in = state.shape
    F1 = params["w1"].shape[1]
    F2 = params["w2"].shape[1]
    A = params["w_mu"].shape[1]

    Dp = _round_up(D_in, 128)          # lane-aligned K dim for the streamed input
    Hp = _round_up(2 * A, 128)         # lane-dense fused head / output width

    # --- Batch tile: multiple of 8, aim for >= 2 grid steps, fit the VMEM cap. ---
    B8 = _round_up(max(B, 1), 8)
    two_step_cap = max(8, _round_up(-(-B8 // 2), 8))       # ceil(B8/2), rounded to 8
    TB = max(8, min(_round_up(block_b, 8), two_step_cap))
    VMEM_CAP = 40 << 20                # conservative for v7x (64 MiB); ample on v5e/v6e
    while _vmem_need_bytes(TB, Dp, F1, F2, Hp) > VMEM_CAP and TB > 8:
        TB = max(8, _round_up(TB // 2, 8))
    B_pad = _round_up(B8, TB)
    vmem_bytes = int(min(max(_vmem_need_bytes(TB, Dp, F1, F2, Hp) + (2 << 20), 4 << 20),
                         VMEM_CAP))

    # --- Pad / pack parameters (weights -> bf16, small params stay f32). ---
    state_p = jnp.pad(state, ((0, B_pad - B), (0, Dp - D_in)))
    w1 = jnp.pad(params["w1"], ((0, Dp - D_in), (0, 0))).astype(jnp.bfloat16)
    w2 = params["w2"].astype(jnp.bfloat16)
    wh = jnp.pad(jnp.concatenate([params["w_mu"], params["w_ls"]], axis=1),
                 ((0, 0), (0, Hp - 2 * A))).astype(jnp.bfloat16)
    bh = jnp.pad(jnp.concatenate([params["b_mu"], params["b_ls"]], axis=1),
                 ((0, 0), (0, Hp - 2 * A)))
    lo = jnp.concatenate([jnp.full((1, A), -_BIG, jnp.float32),
                          jnp.full((1, A), -20.0, jnp.float32),
                          jnp.full((1, Hp - 2 * A), -_BIG, jnp.float32)], axis=1)
    hi = jnp.concatenate([jnp.full((1, A), _BIG, jnp.float32),
                          jnp.full((1, A), 2.0, jnp.float32),
                          jnp.full((1, Hp - 2 * A), _BIG, jnp.float32)], axis=1)

    grid = (B_pad // TB,)
    const = lambda i: (0, 0)

    in_specs = [
        pl.BlockSpec((TB, Dp), lambda i: (i, 0)),   # state: streamed over batch
        pl.BlockSpec((Dp, F1), const),              # w1 (bf16, resident)
        pl.BlockSpec((1, F1), const),               # b1
        pl.BlockSpec((1, F1), const),               # ln1 gamma
        pl.BlockSpec((1, F1), const),               # ln1 beta
        pl.BlockSpec((F1, F2), const),              # w2 (bf16)
        pl.BlockSpec((1, F2), const),               # b2
        pl.BlockSpec((1, F2), const),               # ln2 gamma
        pl.BlockSpec((1, F2), const),               # ln2 beta
        pl.BlockSpec((F2, Hp), const),              # fused head weights (bf16, padded)
        pl.BlockSpec((1, Hp), const),               # fused head bias
        pl.BlockSpec((1, Hp), const),               # clamp lo
        pl.BlockSpec((1, Hp), const),               # clamp hi
    ]
    out_spec = pl.BlockSpec((TB, Hp), lambda i: (i, 0))

    cost = pl.CostEstimate(
        flops=2 * B_pad * (Dp * F1 + F1 * F2 + F2 * Hp),
        transcendentals=2 * B_pad,                  # one rsqrt per row per LayerNorm
        bytes_accessed=int(B_pad * Dp * 4 + B_pad * Hp * 4
                           + (Dp * F1 + F1 * F2 + F2 * Hp) * 2
                           + 3 * (F1 + F2 + Hp) * 4),
    )

    fused = pl.pallas_call(
        _policy_kernel,
        out_shape=jax.ShapeDtypeStruct((B_pad, Hp), jnp.float32),
        grid=grid,
        in_specs=in_specs,
        out_specs=out_spec,
        compiler_params=pltpu.CompilerParams(
            dimension_semantics=("parallel",),
            vmem_limit_bytes=vmem_bytes,
        ),
        cost_estimate=cost,
    )(state_p, w1,
      params["b1"], params["ln1_g"], params["ln1_b"],
      w2,
      params["b2"], params["ln2_g"], params["ln2_b"],
      wh, bh, lo, hi)

    mu = fused[:B, :A]
    log_std = fused[:B, A:2 * A]
    return mu, log_std


def init_params(key, input_dims, fc1_dims, fc2_dims, n_actions):
    """Deterministic init mirroring the PyTorch module's custom uniform init.

    PyTorch Linear stores weight as [out, in]; here weights are stored
    transposed as [in, out] so the kernel does x @ W.
    """
    ks = jax.random.split(key, 8)
    f1 = 1.0 / jnp.sqrt(fc1_dims)   # fc1.weight.size()[0] == fc1_dims
    f2 = 1.0 / jnp.sqrt(fc2_dims)   # fc2.weight.size()[0] == fc2_dims
    f3 = 0.003

    def u(k, shape, lim):
        return jax.random.uniform(k, shape, jnp.float32, -lim, lim)

    return {
        "w1": u(ks[0], (input_dims, fc1_dims), f1),
        "b1": u(ks[1], (1, fc1_dims), f1),
        "ln1_g": jnp.ones((1, fc1_dims), jnp.float32),
        "ln1_b": jnp.zeros((1, fc1_dims), jnp.float32),
        "w2": u(ks[2], (fc1_dims, fc2_dims), f2),
        "b2": u(ks[3], (1, fc2_dims), f2),
        "ln2_g": jnp.ones((1, fc2_dims), jnp.float32),
        "ln2_b": jnp.zeros((1, fc2_dims), jnp.float32),
        "w_mu": u(ks[4], (fc2_dims, n_actions), f3),
        "b_mu": u(ks[5], (1, n_actions), f3),
        "w_ls": u(ks[6], (fc2_dims, n_actions), f3),
        "b_ls": u(ks[7], (1, n_actions), f3),
    }


def _reference_forward(state, p):
    # Pure-JAX f32 reference for correctness check.
    def ln(x, g, b):
        m = jnp.mean(x, axis=-1, keepdims=True)
        v = jnp.mean((x - m) ** 2, axis=-1, keepdims=True)
        return (x - m) / jnp.sqrt(v + LN_EPS) * g + b

    x = jax.nn.relu(ln(state @ p["w1"] + p["b1"], p["ln1_g"], p["ln1_b"]))
    x = jax.nn.relu(ln(x @ p["w2"] + p["b2"], p["ln2_g"], p["ln2_b"]))
    mu = x @ p["w_mu"] + p["b_mu"]
    log_std = jnp.clip(x @ p["w_ls"] + p["b_ls"], -20.0, 2.0)
    return mu, log_std


if __name__ == "__main__":
    # Small shapes consistent with the module: state [batch, input_dims].
    batch, input_dims, fc1_dims, fc2_dims, n_actions = 2, 16, 32, 32, 8

    key = jax.random.PRNGKey(0)
    k_params, k_state = jax.random.split(key)
    params = init_params(k_params, input_dims, fc1_dims, fc2_dims, n_actions)
    state = jax.random.normal(k_state, (batch, input_dims), jnp.float32)

    mu, log_std = policy_forward(state, params)
    jax.block_until_ready((mu, log_std))

    mu_ref, ls_ref = _reference_forward(state, params)
    assert mu.shape == (batch, n_actions) and log_std.shape == (batch, n_actions)
    # bf16 MXU operands -> loosened tolerance vs. the f32 reference.
    assert jnp.allclose(mu, mu_ref, atol=2e-2), "mu mismatch vs reference"
    assert jnp.allclose(log_std, ls_ref, atol=2e-2), "log_std mismatch vs reference"

    print("KERNEL_OK")
</pallas_src>

<mosaic_0001>
module attributes {stable_mosaic.version = 11 : i64} {
  func.func @_policy_kernel(%arg0: i32, %arg1: memref<8x128xf32, #tpu.memory_space<vmem>>, %arg2: memref<128x32xbf16, #tpu.memory_space<vmem>>, %arg3: memref<1x32xf32, #tpu.memory_space<vmem>>, %arg4: memref<1x32xf32, #tpu.memory_space<vmem>>, %arg5: memref<1x32xf32, #tpu.memory_space<vmem>>, %arg6: memref<32x32xbf16, #tpu.memory_space<vmem>>, %arg7: memref<1x32xf32, #tpu.memory_space<vmem>>, %arg8: memref<1x32xf32, #tpu.memory_space<vmem>>, %arg9: memref<1x32xf32, #tpu.memory_space<vmem>>, %arg10: memref<32x128xbf16, #tpu.memory_space<vmem>>, %arg11: memref<1x128xf32, #tpu.memory_space<vmem>>, %arg12: memref<1x128xf32, #tpu.memory_space<vmem>>, %arg13: memref<1x128xf32, #tpu.memory_space<vmem>>, %arg14: memref<8x128xf32, #tpu.memory_space<vmem>>) attributes {dimension_semantics = [#tpu.dimension_semantics<parallel>], iteration_bounds = array<i64: 1>, scalar_prefetch = 0 : i64, scratch_operands = 0 : i64, tpu.core_type = #tpu.core_type<tc>, window_params = [{transform_indices = @transform_0, window_bounds = array<i64: 8, 128>}, {pipeline_mode = #tpu.pipeline_mode<synchronous>, transform_indices = @transform_1, window_bounds = array<i64: 128, 32>}, {pipeline_mode = #tpu.pipeline_mode<synchronous>, transform_indices = @transform_2, window_bounds = array<i64: 1, 32>}, {pipeline_mode = #tpu.pipeline_mode<synchronous>, transform_indices = @transform_3, window_bounds = array<i64: 1, 32>}, {pipeline_mode = #tpu.pipeline_mode<synchronous>, transform_indices = @transform_4, window_bounds = array<i64: 1, 32>}, {pipeline_mode = #tpu.pipeline_mode<synchronous>, transform_indices = @transform_5, window_bounds = array<i64: 32, 32>}, {pipeline_mode = #tpu.pipeline_mode<synchronous>, transform_indices = @transform_6, window_bounds = array<i64: 1, 32>}, {pipeline_mode = #tpu.pipeline_mode<synchronous>, transform_indices = @transform_7, window_bounds = array<i64: 1, 32>}, {pipeline_mode = #tpu.pipeline_mode<synchronous>, transform_indices = @transform_8, window_bounds = array<i64: 1, 32>}, {pipeline_mode = #tpu.pipeline_mode<synchronous>, transform_indices = @transform_9, window_bounds = array<i64: 32, 128>}, {pipeline_mode = #tpu.pipeline_mode<synchronous>, transform_indices = @transform_10, window_bounds = array<i64: 1, 128>}, {pipeline_mode = #tpu.pipeline_mode<synchronous>, transform_indices = @transform_11, window_bounds = array<i64: 1, 128>}, {pipeline_mode = #tpu.pipeline_mode<synchronous>, transform_indices = @transform_12, window_bounds = array<i64: 1, 128>}, {transform_indices = @transform_13, window_bounds = array<i64: 8, 128>}]} {
    %c0 = arith.constant 0 : index
    %c0_0 = arith.constant 0 : index
    %0 = vector.load %arg1[%c0, %c0_0] : memref<8x128xf32, #tpu.memory_space<vmem>>, vector<8x128xf32>
    %1 = arith.truncf %0 : vector<8x128xf32> to vector<8x128xbf16>
    %c0_1 = arith.constant 0 : index
    %c0_2 = arith.constant 0 : index
    %2 = vector.load %arg2[%c0_1, %c0_2] : memref<128x32xbf16, #tpu.memory_space<vmem>>, vector<128x32xbf16>
    %cst = arith.constant dense<0.000000e+00> : vector<8x32xf32>
    %3 = tpu.matmul %1, %2, %cst {dimension_numbers = #tpu.dot_dimension_numbers<[1], [0], [0], [1], [0, 0, 1, 1], [], []>} : vector<8x128xbf16>, vector<128x32xbf16>, vector<8x32xf32> -> vector<8x32xf32>
    %c0_3 = arith.constant 0 : index
    %c0_4 = arith.constant 0 : index
    %4 = vector.load %arg3[%c0_3, %c0_4] : memref<1x32xf32, #tpu.memory_space<vmem>>, vector<1x32xf32>
    %5 = vector.broadcast %4 : vector<1x32xf32> to vector<8x32xf32>
    %6 = arith.addf %3, %5 : vector<8x32xf32>
    %c0_5 = arith.constant 0 : index
    %c0_6 = arith.constant 0 : index
    %7 = vector.load %arg4[%c0_5, %c0_6] : memref<1x32xf32, #tpu.memory_space<vmem>>, vector<1x32xf32>
    %c0_7 = arith.constant 0 : index
    %c0_8 = arith.constant 0 : index
    %8 = vector.load %arg5[%c0_7, %c0_8] : memref<1x32xf32, #tpu.memory_space<vmem>>, vector<1x32xf32>
    %cst_9 = arith.constant dense<0.000000e+00> : vector<8xf32>
    %9 = vector.multi_reduction <add>, %6, %cst_9 [1] : vector<8x32xf32> to vector<8xf32>
    %10 = vector.shape_cast %9 : vector<8xf32> to vector<8x1xf32>
    %cst_10 = arith.constant 3.200000e+01 : f32
    %11 = vector.broadcast %cst_10 : f32 to vector<8x1xf32>
    %12 = arith.divf %10, %11 : vector<8x1xf32>
    %13 = vector.broadcast %12 : vector<8x1xf32> to vector<8x32xf32>
    %14 = arith.subf %6, %13 : vector<8x32xf32>
    %15 = arith.mulf %14, %14 : vector<8x32xf32>
    %cst_11 = arith.constant dense<0.000000e+00> : vector<8xf32>
    %16 = vector.multi_reduction <add>, %15, %cst_11 [1] : vector<8x32xf32> to vector<8xf32>
    %17 = vector.shape_cast %16 : vector<8xf32> to vector<8x1xf32>
    %cst_12 = arith.constant 3.200000e+01 : f32
    %18 = vector.broadcast %cst_12 : f32 to vector<8x1xf32>
    %19 = arith.divf %17, %18 : vector<8x1xf32>
    %cst_13 = arith.constant 9.99999974E-6 : f32
    %20 = vector.broadcast %cst_13 : f32 to vector<8x1xf32>
    %21 = arith.addf %19, %20 : vector<8x1xf32>
    %22 = math.rsqrt %21 : vector<8x1xf32>
    %23 = vector.broadcast %22 : vector<8x1xf32> to vector<8x32xf32>
    %24 = arith.mulf %14, %23 : vector<8x32xf32>
    %25 = vector.broadcast %7 : vector<1x32xf32> to vector<8x32xf32>
    %26 = arith.mulf %24, %25 : vector<8x32xf32>
    %27 = vector.broadcast %8 : vector<1x32xf32> to vector<8x32xf32>
    %28 = arith.addf %26, %27 : vector<8x32xf32>
    %cst_14 = arith.constant 0.000000e+00 : f32
    %29 = vector.broadcast %cst_14 : f32 to vector<8x32xf32>
    %30 = arith.maximumf %28, %29 : vector<8x32xf32>
    %31 = arith.truncf %30 : vector<8x32xf32> to vector<8x32xbf16>
    %c0_15 = arith.constant 0 : index
    %c0_16 = arith.constant 0 : index
    %32 = vector.load %arg6[%c0_15, %c0_16] : memref<32x32xbf16, #tpu.memory_space<vmem>>, vector<32x32xbf16>
    %cst_17 = arith.constant dense<0.000000e+00> : vector<8x32xf32>
    %33 = tpu.matmul %31, %32, %cst_17 {dimension_numbers = #tpu.dot_dimension_numbers<[1], [0], [0], [1], [0, 0, 1, 1], [], []>} : vector<8x32xbf16>, vector<32x32xbf16>, vector<8x32xf32> -> vector<8x32xf32>
    %c0_18 = arith.constant 0 : index
    %c0_19 = arith.constant 0 : index
    %34 = vector.load %arg7[%c0_18, %c0_19] : memref<1x32xf32, #tpu.memory_space<vmem>>, vector<1x32xf32>
    %35 = vector.broadcast %34 : vector<1x32xf32> to vector<8x32xf32>
    %36 = arith.addf %33, %35 : vector<8x32xf32>
    %c0_20 = arith.constant 0 : index
    %c0_21 = arith.constant 0 : index
    %37 = vector.load %arg8[%c0_20, %c0_21] : memref<1x32xf32, #tpu.memory_space<vmem>>, vector<1x32xf32>
    %c0_22 = arith.constant 0 : index
    %c0_23 = arith.constant 0 : index
    %38 = vector.load %arg9[%c0_22, %c0_23] : memref<1x32xf32, #tpu.memory_space<vmem>>, vector<1x32xf32>
    %cst_24 = arith.constant dense<0.000000e+00> : vector<8xf32>
    %39 = vector.multi_reduction <add>, %36, %cst_24 [1] : vector<8x32xf32> to vector<8xf32>
    %40 = vector.shape_cast %39 : vector<8xf32> to vector<8x1xf32>
    %cst_25 = arith.constant 3.200000e+01 : f32
    %41 = vector.broadcast %cst_25 : f32 to vector<8x1xf32>
    %42 = arith.divf %40, %41 : vector<8x1xf32>
    %43 = vector.broadcast %42 : vector<8x1xf32> to vector<8x32xf32>
    %44 = arith.subf %36, %43 : vector<8x32xf32>
    %45 = arith.mulf %44, %44 : vector<8x32xf32>
    %cst_26 = arith.constant dense<0.000000e+00> : vector<8xf32>
    %46 = vector.multi_reduction <add>, %45, %cst_26 [1] : vector<8x32xf32> to vector<8xf32>
    %47 = vector.shape_cast %46 : vector<8xf32> to vector<8x1xf32>
    %cst_27 = arith.constant 3.200000e+01 : f32
    %48 = vector.broadcast %cst_27 : f32 to vector<8x1xf32>
    %49 = arith.divf %47, %48 : vector<8x1xf32>
    %cst_28 = arith.constant 9.99999974E-6 : f32
    %50 = vector.broadcast %cst_28 : f32 to vector<8x1xf32>
    %51 = arith.addf %49, %50 : vector<8x1xf32>
    %52 = math.rsqrt %51 : vector<8x1xf32>
    %53 = vector.broadcast %52 : vector<8x1xf32> to vector<8x32xf32>
    %54 = arith.mulf %44, %53 : vector<8x32xf32>
    %55 = vector.broadcast %37 : vector<1x32xf32> to vector<8x32xf32>
    %56 = arith.mulf %54, %55 : vector<8x32xf32>
    %57 = vector.broadcast %38 : vector<1x32xf32> to vector<8x32xf32>
    %58 = arith.addf %56, %57 : vector<8x32xf32>
    %cst_29 = arith.constant 0.000000e+00 : f32
    %59 = vector.broadcast %cst_29 : f32 to vector<8x32xf32>
    %60 = arith.maximumf %58, %59 : vector<8x32xf32>
    %61 = arith.truncf %60 : vector<8x32xf32> to vector<8x32xbf16>
    %c0_30 = arith.constant 0 : index
    %c0_31 = arith.constant 0 : index
    %62 = vector.load %arg10[%c0_30, %c0_31] : memref<32x128xbf16, #tpu.memory_space<vmem>>, vector<32x128xbf16>
    %cst_32 = arith.constant dense<0.000000e+00> : vector<8x128xf32>
    %63 = tpu.matmul %61, %62, %cst_32 {dimension_numbers = #tpu.dot_dimension_numbers<[1], [0], [0], [1], [0, 0, 1, 1], [], []>} : vector<8x32xbf16>, vector<32x128xbf16>, vector<8x128xf32> -> vector<8x128xf32>
    %c0_33 = arith.constant 0 : index
    %c0_34 = arith.constant 0 : index
    %64 = vector.load %arg11[%c0_33, %c0_34] : memref<1x128xf32, #tpu.memory_space<vmem>>, vector<1x128xf32>
    %65 = vector.broadcast %64 : vector<1x128xf32> to vector<8x128xf32>
    %66 = arith.addf %63, %65 : vector<8x128xf32>
    %c0_35 = arith.constant 0 : index
    %c0_36 = arith.constant 0 : index
    %67 = vector.load %arg12[%c0_35, %c0_36] : memref<1x128xf32, #tpu.memory_space<vmem>>, vector<1x128xf32>
    %68 = vector.broadcast %67 : vector<1x128xf32> to vector<8x128xf32>
    %69 = arith.maximumf %66, %68 : vector<8x128xf32>
    %c0_37 = arith.constant 0 : index
    %c0_38 = arith.constant 0 : index
    %70 = vector.load %arg13[%c0_37, %c0_38] : memref<1x128xf32, #tpu.memory_space<vmem>>, vector<1x128xf32>
    %71 = vector.broadcast %70 : vector<1x128xf32> to vector<8x128xf32>
    %72 = arith.minimumf %69, %71 : vector<8x128xf32>
    %c0_39 = arith.constant 0 : index
    %c0_40 = arith.constant 0 : index
    %73 = vector.load %arg14[%c0_39, %c0_40] : memref<8x128xf32, #tpu.memory_space<vmem>>, vector<8x128xf32>
    tpu.vector_store %arg14[%c0_39, %c0_40], %72 {strides = array<i32>} : memref<8x128xf32, #tpu.memory_space<vmem>>, vector<8x128xf32>,
    return
  }
  func.func @transform_0(%arg0: i32) -> (i32, i32) {
    %c0_i32 = arith.constant 0 : i32
    %c0_i32_0 = arith.constant 0 : i32
    return %arg0, %c0_i32 : i32, i32
  }
  func.func @transform_1(%arg0: i32) -> (i32, i32) {
    %c0_i32 = arith.constant 0 : i32
    %c0_i32_0 = arith.constant 0 : i32
    %c0_i32_1 = arith.constant 0 : i32
    return %c0_i32, %c0_i32_0 : i32, i32
  }
  func.func @transform_2(%arg0: i32) -> (i32, i32) {
    %c0_i32 = arith.constant 0 : i32
    %c0_i32_0 = arith.constant 0 : i32
    %c0_i32_1 = arith.constant 0 : i32
    return %c0_i32, %c0_i32_0 : i32, i32
  }
  func.func @transform_3(%arg0: i32) -> (i32, i32) {
    %c0_i32 = arith.constant 0 : i32
    %c0_i32_0 = arith.constant 0 : i32
    %c0_i32_1 = arith.constant 0 : i32
    return %c0_i32, %c0_i32_0 : i32, i32
  }
  func.func @transform_4(%arg0: i32) -> (i32, i32) {
    %c0_i32 = arith.constant 0 : i32
    %c0_i32_0 = arith.constant 0 : i32
    %c0_i32_1 = arith.constant 0 : i32
    return %c0_i32, %c0_i32_0 : i32, i32
  }
  func.func @transform_5(%arg0: i32) -> (i32, i32) {
    %c0_i32 = arith.constant 0 : i32
    %c0_i32_0 = arith.constant 0 : i32
    %c0_i32_1 = arith.constant 0 : i32
    return %c0_i32, %c0_i32_0 : i32, i32
  }
  func.func @transform_6(%arg0: i32) -> (i32, i32) {
    %c0_i32 = arith.constant 0 : i32
    %c0_i32_0 = arith.constant 0 : i32
    %c0_i32_1 = arith.constant 0 : i32
    return %c0_i32, %c0_i32_0 : i32, i32
  }
  func.func @transform_7(%arg0: i32) -> (i32, i32) {
    %c0_i32 = arith.constant 0 : i32
    %c0_i32_0 = arith.constant 0 : i32
    %c0_i32_1 = arith.constant 0 : i32
    return %c0_i32, %c0_i32_0 : i32, i32
  }
  func.func @transform_8(%arg0: i32) -> (i32, i32) {
    %c0_i32 = arith.constant 0 : i32
    %c0_i32_0 = arith.constant 0 : i32
    %c0_i32_1 = arith.constant 0 : i32
    return %c0_i32, %c0_i32_0 : i32, i32
  }
  func.func @transform_9(%arg0: i32) -> (i32, i32) {
    %c0_i32 = arith.constant 0 : i32
    %c0_i32_0 = arith.constant 0 : i32
    %c0_i32_1 = arith.constant 0 : i32
    return %c0_i32, %c0_i32_0 : i32, i32
  }
  func.func @transform_10(%arg0: i32) -> (i32, i32) {
    %c0_i32 = arith.constant 0 : i32
    %c0_i32_0 = arith.constant 0 : i32
    %c0_i32_1 = arith.constant 0 : i32
    return %c0_i32, %c0_i32_0 : i32, i32
  }
  func.func @transform_11(%arg0: i32) -> (i32, i32) {
    %c0_i32 = arith.constant 0 : i32
    %c0_i32_0 = arith.constant 0 : i32
    %c0_i32_1 = arith.constant 0 : i32
    return %c0_i32, %c0_i32_0 : i32, i32
  }
  func.func @transform_12(%arg0: i32) -> (i32, i32) {
    %c0_i32 = arith.constant 0 : i32
    %c0_i32_0 = arith.constant 0 : i32
    %c0_i32_1 = arith.constant 0 : i32
    return %c0_i32, %c0_i32_0 : i32, i32
  }
  func.func @transform_13(%arg0: i32) -> (i32, i32) {
    %c0_i32 = arith.constant 0 : i32
    %c0_i32_0 = arith.constant 0 : i32
    return %arg0, %c0_i32 : i32, i32
  }
}

</mosaic_0001>

<llo_original>
// kernel: policy_forward.1
$region0: #{policy_forward.1}
  #allocation0 [shape = 'u32[]', space=smem, size = 0x4, offset = 0x4, fixed_abs, tag = 'smem constant byte address 0x4 - core index']
  #allocation1 [shape = 'u32[144,128]{1,0:T(1,128)}', space=vmem, size = 0x12000, scoped, tag = 'internal scratch']
  %s0 = inlined_call_operand.vmem [shape: f32[8,128], index: 0, kind: input, shape index: {}]
  %s1 = inlined_call_operand.vmem [shape: bf16[128,32], index: 1, kind: input, shape index: {}]
  %s2 = inlined_call_operand.vmem [shape: f32[1,32], index: 2, kind: input, shape index: {}]
  %s3 = inlined_call_operand.vmem [shape: f32[1,32], index: 3, kind: input, shape index: {}]
  %s4 = inlined_call_operand.vmem [shape: f32[1,32], index: 4, kind: input, shape index: {}]
  %s5 = inlined_call_operand.vmem [shape: bf16[32,32], index: 5, kind: input, shape index: {}]
  %s6 = inlined_call_operand.vmem [shape: f32[1,32], index: 6, kind: input, shape index: {}]
  %s7 = inlined_call_operand.vmem [shape: f32[1,32], index: 7, kind: input, shape index: {}]
  %s8 = inlined_call_operand.vmem [shape: f32[1,32], index: 8, kind: input, shape index: {}]
  %s9 = inlined_call_operand.vmem [shape: bf16[32,128], index: 9, kind: input, shape index: {}]
  %s10 = inlined_call_operand.vmem [shape: f32[1,128], index: 10, kind: input, shape index: {}]
  %s11 = inlined_call_operand.vmem [shape: f32[1,128], index: 11, kind: input, shape index: {}]
  %s12 = inlined_call_operand.vmem [shape: f32[1,128], index: 12, kind: input, shape index: {}]
  %s13 = inlined_call_operand.vmem [shape: f32[8,128], index: 13, kind: output, shape index: {}]
  %s14 = sld [smem:[#allocation0]]
  $region62: #{policy_forward.1} parent=0
    _
  %s16 = ssub.s32 1, %s14
  %s17 = scalar_select 0, %s16, %s14
  // Predicated region
  $region2: #{policy_forward.1} parent=0 // pred_check
    _
  $region3: #{policy_forward.1} parent=0 // pred_check_branch
    %19 = sbr.rel (0) target = $region5
  $region4: #{policy_forward.1} parent=0 // pred_region
    _
  $region5: #{policy_forward.1} parent=0 // pred_fallthru
    _
  // Predicated region
  $region6: #{policy_forward.1} parent=0 // pred_check
    _
  $region7: #{policy_forward.1} parent=0 // pred_check_branch
    %21 = sbr.rel (0) target = $region9
  $region8: #{policy_forward.1} parent=0 // pred_region
    _
  $region9: #{policy_forward.1} parent=0 // pred_fallthru
    _
  // Predicated region
  $region10: #{policy_forward.1} parent=0 // pred_check
    _
  $region11: #{policy_forward.1} parent=0 // pred_check_branch
    %23 = sbr.rel (0) target = $region13
  $region12: #{policy_forward.1} parent=0 // pred_region
    _
  $region13: #{policy_forward.1} parent=0 // pred_fallthru
    _
  // Predicated region
  $region14: #{policy_forward.1} parent=0 // pred_check
    _
  $region15: #{policy_forward.1} parent=0 // pred_check_branch
    %25 = sbr.rel (0) target = $region17
  $region16: #{policy_forward.1} parent=0 // pred_region
    _
  $region17: #{policy_forward.1} parent=0 // pred_fallthru
    _
  // Predicated region
  $region18: #{policy_forward.1} parent=0 // pred_check
    _
  $region19: #{policy_forward.1} parent=0 // pred_check_branch
    %27 = sbr.rel (0) target = $region21
  $region20: #{policy_forward.1} parent=0 // pred_region
    _
  $region21: #{policy_forward.1} parent=0 // pred_fallthru
    _
  // Predicated region
  $region22: #{policy_forward.1} parent=0 // pred_check
    _
  $region23: #{policy_forward.1} parent=0 // pred_check_branch
    %29 = sbr.rel (0) target = $region25
  $region24: #{policy_forward.1} parent=0 // pred_region
    _
  $region25: #{policy_forward.1} parent=0 // pred_fallthru
    _
  // Predicated region
  $region26: #{policy_forward.1} parent=0 // pred_check
    _
  $region27: #{policy_forward.1} parent=0 // pred_check_branch
    %31 = sbr.rel (0) target = $region29
  $region28: #{policy_forward.1} parent=0 // pred_region
    _
  $region29: #{policy_forward.1} parent=0 // pred_fallthru
    _
  // Predicated region
  $region30: #{policy_forward.1} parent=0 // pred_check
    _
  $region31: #{policy_forward.1} parent=0 // pred_check_branch
    %33 = sbr.rel (0) target = $region33
  $region32: #{policy_forward.1} parent=0 // pred_region
    _
  $region33: #{policy_forward.1} parent=0 // pred_fallthru
    _
  // Predicated region
  $region34: #{policy_forward.1} parent=0 // pred_check
    _
  $region35: #{policy_forward.1} parent=0 // pred_check_branch
    %35 = sbr.rel (0) target = $region37
  $region36: #{policy_forward.1} parent=0 // pred_region
    _
  $region37: #{policy_forward.1} parent=0 // pred_fallthru
    _
  // Predicated region
  $region38: #{policy_forward.1} parent=0 // pred_check
    _
  $region39: #{policy_forward.1} parent=0 // pred_check_branch
    %37 = sbr.rel (0) target = $region41
  $region40: #{policy_forward.1} parent=0 // pred_region
    _
  $region41: #{policy_forward.1} parent=0 // pred_fallthru
    _
  // Predicated region
  $region42: #{policy_forward.1} parent=0 // pred_check
    _
  $region43: #{policy_forward.1} parent=0 // pred_check_branch
    %39 = sbr.rel (0) target = $region45
  $region44: #{policy_forward.1} parent=0 // pred_region
    _
  $region45: #{policy_forward.1} parent=0 // pred_fallthru
    _
  // Predicated region
  $region46: #{policy_forward.1} parent=0 // pred_check
    _
  $region47: #{policy_forward.1} parent=0 // pred_check_branch
    %41 = sbr.rel (0) target = $region49
  $region48: #{policy_forward.1} parent=0 // pred_region
    _
  $region49: #{policy_forward.1} parent=0 // pred_fallthru
    _
  // Predicated region
  $region50: #{policy_forward.1} parent=0 // pred_check
    _
  $region51: #{policy_forward.1} parent=0 // pred_check_branch
    %43 = sbr.rel (0) target = $region53
  $region52: #{policy_forward.1} parent=0 // pred_region
    _
  $region53: #{policy_forward.1} parent=0 // pred_fallthru
    _
  %v45 = vld [vmem:[%s0] sm:$0xff]
  %v46 = vpack.c.bf16 %v45, %v45
  %v47 = vld [vmem:[%s1] sm:$0xf]
  %v48 = vld [vmem:[%s1 + $0x4] sm:$0xf]
  %v49 = vld [vmem:[%s1 + $0x8] sm:$0xf]
  %v50 = vld [vmem:[%s1 + $0xc] sm:$0xf]
  %v51 = vld [vmem:[%s1 + $0x10] sm:$0xf]
  %v52 = vld [vmem:[%s1 + $0x14] sm:$0xf]
  %v53 = vld [vmem:[%s1 + $0x18] sm:$0xf]
  %v54 = vld [vmem:[%s1 + $0x1c] sm:$0xf]
  %v55 = vld [vmem:[%s1 + $0x20] sm:$0xf]
  %v56 = vld [vmem:[%s1 + $0x24] sm:$0xf]
  %v57 = vld [vmem:[%s1 + $0x28] sm:$0xf]
  %v58 = vld [vmem:[%s1 + $0x2c] sm:$0xf]
  %v59 = vld [vmem:[%s1 + $0x30] sm:$0xf]
  %v60 = vld [vmem:[%s1 + $0x34] sm:$0xf]
  %v61 = vld [vmem:[%s1 + $0x38] sm:$0xf]
  %v62 = vld [vmem:[%s1 + $0x3c] sm:$0xf]
  %v63 = vld [vmem:[%s2] sm:$0x1]
  %v65 = vlaneseq
  %v66 = vshrl.u32 %v65, 7
  %v67 = vsub.s32 0, %v66
  %v68 = vrot.slane %v63, %v67
  %v86 = vunpack.c.l.b16 %v47
  %v87 = vunpack.c.l.b16 %v48
  %v88 = vunpack.c.l.b16 %v49
  %v89 = vunpack.c.l.b16 %v50
  %v90 = vunpack.c.l.b16 %v51
  %v91 = vunpack.c.l.b16 %v52
  %v92 = vunpack.c.l.b16 %v53
  %v93 = vunpack.c.l.b16 %v54
  %v94 = vunpack.c.l.b16 %v55
  %v95 = vunpack.c.l.b16 %v56
  %v96 = vunpack.c.l.b16 %v57
  %v97 = vunpack.c.l.b16 %v58
  %v98 = vunpack.c.l.b16 %v59
  %v99 = vunpack.c.l.b16 %v60
  %v100 = vunpack.c.l.b16 %v61
  %v101 = vunpack.c.l.b16 %v62
  %v102 = vpack.c.b16 %v87, %v86
  %v103 = vpack.c.b16 %v89, %v88
  %v104 = vpack.c.b16 %v91, %v90
  %v105 = vpack.c.b16 %v93, %v92
  %v106 = vpack.c.b16 %v95, %v94
  %v107 = vpack.c.b16 %v97, %v96
  %v108 = vpack.c.b16 %v99, %v98
  %v109 = vpack.c.b16 %v101, %v100
  %118 = vmatprep.subr.bf16.mxu0 0
  %119 = vmatpush1.bf16.msra.mxu0 %v109
  %120 = vmatprep.subr.bf16.mxu0 0
  %121 = vmatpush1.bf16.msra.mxu0 %v108
  %122 = vmatprep.subr.bf16.mxu0 0
  %123 = vmatpush1.bf16.msra.mxu0 %v107
  %124 = vmatprep.subr.bf16.mxu0 0
  %125 = vmatpush1.bf16.msra.mxu0 %v106
  %126 = vmatprep.subr.bf16.mxu0 0
  %127 = vmatpush1.bf16.msra.mxu0 %v105
  %128 = vmatprep.subr.bf16.mxu0 0
  %129 = vmatpush1.bf16.msra.mxu0 %v104
  %130 = vmatprep.subr.bf16.mxu0 0
  %131 = vmatpush1.bf16.msra.mxu0 %v103
  %132 = vmatprep.subr.bf16.mxu0 0
  %133 = vmatpush1.bf16.msra.mxu0 %v102
  %134 = vmatprep.subr.bf16.mxu0 0
  %135 = vmatpush2.bf16.msra.mxu0 0
  %136 = vmatprep.subr.bf16.mxu0 0
  %137 = vmatpush2.bf16.msra.mxu0 0
  %138 = vmatprep.subr.bf16.mxu0 0
  %139 = vmatpush2.bf16.msra.mxu0 0
  %140 = vmatprep.subr.bf16.mxu0 0
  %141 = vmatpush2.bf16.msra.mxu0 0
  %142 = vmatprep.subr.bf16.mxu0 0
  %143 = vmatpush2.bf16.msra.mxu0 0
  %144 = vmatprep.subr.bf16.mxu0 0
  %145 = vmatpush2.bf16.msra.mxu0 0
  %146 = vmatprep.subr.bf16.mxu0 0
  %147 = vmatpush2.bf16.msra.mxu0 0
  %148 = vmatprep.subr.bf16.mxu0 0
  %149 = vmatpush2.bf16.msra.mxu0 0
  %150 = vmatprep.mubr.bf16.mxu0 0
  %151 = vmatmul.mubr.bf16.gmra.mxu0 %v46
  %v152 = vpop.f32.mrf.mxu0
  %v153 = vadd.f32 %v68, %v152
  %v154 = vpop.f32.mrf.mxu0
  %v155 = vpop.f32.mrf.mxu0
  %v156 = vpop.f32.mrf.mxu0
  %157 = vdwg.mxu0
  %v158 = vld [vmem:[%s3] sm:$0x1]
  %v159 = vld [vmem:[%s4] sm:$0x1]
  %vm160 = vcmask 261120
  %v161 = vsel %vm160, %v153, 0.0
  %162 = vadd.xlane.f32.xlu0 %v161
  %v163 = vpop.xlane.xlu0 %162
  %v164 = vrcp.pop 32.0
  %v165 = vmul.f32 %v163, %v164
  %v166 = vsub.f32 %v153, %v165
  %v167 = vmul.f32 %v166, %v166
  %v168 = vsel %vm160, %v167, 0.0
  %169 = vadd.xlane.f32.xlu0 %v168
  %v170 = vpop.xlane.xlu0 %169
  %v171 = vmul.f32 %v170, %v164
  %v172 = vadd.f32 %v171, 1e-05
  %v173 = vrsqrt.pop %v172
  %v174 = vmul.f32 %v166, %v173
  %v176 = vlaneseq
  %v177 = vshrl.u32 %v176, 7
  %v178 = vsub.s32 0, %v177
  %v179 = vrot.slane %v158, %v178
  %v181 = vmul.f32 %v174, %v179
  %v183 = vlaneseq
  %v184 = vshrl.u32 %v183, 7
  %v185 = vsub.s32 0, %v184
  %v186 = vrot.slane %v159, %v185
  %v188 = vadd.f32 %v181, %v186
  %v189 = vmax.f32 %v188, 0.0
  %v190 = vpack.c.bf16 %v189, %v189
  %v191 = vld [vmem:[%s5] sm:$0xf]
  %v192 = vld [vmem:[%s5 + $0x4] sm:$0xf]
  %v193 = vld [vmem:[%s5 + $0x8] sm:$0xf]
  %v194 = vld [vmem:[%s5 + $0xc] sm:$0xf]
  %v195 = vld [vmem:[%s6] sm:$0x1]
  %v197 = vlaneseq
  %v198 = vshrl.u32 %v197, 7
  %v199 = vsub.s32 0, %v198
  %v200 = vrot.slane %v195, %v199
  %v206 = vunpack.c.l.b16 %v191
  %v207 = vunpack.c.l.b16 %v192
  %v208 = vunpack.c.l.b16 %v193
  %v209 = vunpack.c.l.b16 %v194
  %v210 = vpack.c.b16 %v207, %v206
  %v211 = vpack.c.b16 %v209, %v208
  %v215 = vsel %vm160, %v190, 0
  %217 = vmatprep.subr.bf16.mxu0 0
  %218 = vmatpush1.bf16.msra.mxu0 0
  %219 = vmatprep.subr.bf16.mxu0 0
  %220 = vmatpush1.bf16.msra.mxu0 0
  %221 = vmatprep.subr.bf16.mxu0 0
  %222 = vmatpush1.bf16.msra.mxu0 0
  %223 = vmatprep.subr.bf16.mxu0 0
  %224 = vmatpush1.bf16.msra.mxu0 0
  %225 = vmatprep.subr.bf16.mxu0 0
  %226 = vmatpush1.bf16.msra.mxu0 0
  %227 = vmatprep.subr.bf16.mxu0 0
  %228 = vmatpush1.bf16.msra.mxu0 0
  %229 = vmatprep.subr.bf16.mxu0 0
  %230 = vmatpush1.bf16.msra.mxu0 %v211
  %231 = vmatprep.subr.bf16.mxu0 0
  %232 = vmatpush1.bf16.msra.mxu0 %v210
  %233 = vmatprep.subr.bf16.mxu0 0
  %234 = vmatpush2.bf16.msra.mxu0 0
  %235 = vmatprep.subr.bf16.mxu0 0
  %236 = vmatpush2.bf16.msra.mxu0 0
  %237 = vmatprep.subr.bf16.mxu0 0
  %238 = vmatpush2.bf16.msra.mxu0 0
  %239 = vmatprep.subr.bf16.mxu0 0
  %240 = vmatpush2.bf16.msra.mxu0 0
  %241 = vmatprep.subr.bf16.mxu0 0
  %242 = vmatpush2.bf16.msra.mxu0 0
  %243 = vmatprep.subr.bf16.mxu0 0
  %244 = vmatpush2.bf16.msra.mxu0 0
  %245 = vmatprep.subr.bf16.mxu0 0
  %246 = vmatpush2.bf16.msra.mxu0 0
  %247 = vmatprep.subr.bf16.mxu0 0
  %248 = vmatpush2.bf16.msra.mxu0 0
  %249 = vmatprep.mubr.bf16.mxu0 0
  %250 = vmatmul.mubr.bf16.gmra.mxu0 %v215
  %v251 = vpop.f32.mrf.mxu0
  %v252 = vadd.f32 %v200, %v251
  %v253 = vpop.f32.mrf.mxu0
  %v254 = vpop.f32.mrf.mxu0
  %v255 = vpop.f32.mrf.mxu0
  %256 = vdwg.mxu0
  %v257 = vld [vmem:[%s7] sm:$0x1]
  %v258 = vld [vmem:[%s8] sm:$0x1]
  %v259 = vsel %vm160, %v252, 0.0
  %260 = vadd.xlane.f32.xlu0 %v259
  %v261 = vpop.xlane.xlu0 %260
  %v262 = vmul.f32 %v261, %v164
  %v263 = vsub.f32 %v252, %v262
  %v264 = vmul.f32 %v263, %v263
  %v265 = vsel %vm160, %v264, 0.0
  %266 = vadd.xlane.f32.xlu0 %v265
  %v267 = vpop.xlane.xlu0 %266
  %v268 = vmul.f32 %v267, %v164
  %v269 = vadd.f32 %v268, 1e-05
  %v270 = vrsqrt.pop %v269
  %v271 = vmul.f32 %v263, %v270
  %v273 = vlaneseq
  %v274 = vshrl.u32 %v273, 7
  %v275 = vsub.s32 0, %v274
  %v276 = vrot.slane %v257, %v275
  %v278 = vmul.f32 %v271, %v276
  %v280 = vlaneseq
  %v281 = vshrl.u32 %v280, 7
  %v282 = vsub.s32 0, %v281
  %v283 = vrot.slane %v258, %v282
  %v285 = vadd.f32 %v278, %v283
  %v286 = vmax.f32 %v285, 0.0
  %v287 = vpack.c.bf16 %v286, %v286
  %v288 = vld [vmem:[%s9] sm:$0xf]
  %v289 = vld [vmem:[%s9 + $0x4] sm:$0xf]
  %v290 = vld [vmem:[%s9 + $0x8] sm:$0xf]
  %v291 = vld [vmem:[%s9 + $0xc] sm:$0xf]
  %v292 = vld [vmem:[%s10] sm:$0x1]
  %v294 = vlaneseq
  %v295 = vshrl.u32 %v294, 7
  %v296 = vsub.s32 0, %v295
  %v297 = vrot.slane %v292, %v296
  %v303 = vunpack.c.l.b16 %v288
  %v304 = vunpack.c.l.b16 %v289
  %v305 = vunpack.c.l.b16 %v290
  %v306 = vunpack.c.l.b16 %v291
  %v307 = vpack.c.b16 %v304, %v303
  %v308 = vpack.c.b16 %v306, %v305
  %v312 = vsel %vm160, %v287, 0
  %314 = vmatprep.subr.bf16.mxu0 0
  %315 = vmatpush1.bf16.msra.mxu0 0
  %316 = vmatprep.subr.bf16.mxu0 0
  %317 = vmatpush1.bf16.msra.mxu0 0
  %318 = vmatprep.subr.bf16.mxu0 0
  %319 = vmatpush1.bf16.msra.mxu0 0
  %320 = vmatprep.subr.bf16.mxu0 0
  %321 = vmatpush1.bf16.msra.mxu0 0
  %322 = vmatprep.subr.bf16.mxu0 0
  %323 = vmatpush1.bf16.msra.mxu0 0
  %324 = vmatprep.subr.bf16.mxu0 0
  %325 = vmatpush1.bf16.msra.mxu0 0
  %326 = vmatprep.subr.bf16.mxu0 0
  %327 = vmatpush1.bf16.msra.mxu0 %v308
  %328 = vmatprep.subr.bf16.mxu0 0
  %329 = vmatpush1.bf16.msra.mxu0 %v307
  %330 = vmatprep.subr.bf16.mxu0 0
  %331 = vmatpush2.bf16.msra.mxu0 0
  %332 = vmatprep.subr.bf16.mxu0 0
  %333 = vmatpush2.bf16.msra.mxu0 0
  %334 = vmatprep.subr.bf16.mxu0 0
  %335 = vmatpush2.bf16.msra.mxu0 0
  %336 = vmatprep.subr.bf16.mxu0 0
  %337 = vmatpush2.bf16.msra.mxu0 0
  %338 = vmatprep.subr.bf16.mxu0 0
  %339 = vmatpush2.bf16.msra.mxu0 0
  %340 = vmatprep.subr.bf16.mxu0 0
  %341 = vmatpush2.bf16.msra.mxu0 0
  %342 = vmatprep.subr.bf16.mxu0 0
  %343 = vmatpush2.bf16.msra.mxu0 0
  %344 = vmatprep.subr.bf16.mxu0 0
  %345 = vmatpush2.bf16.msra.mxu0 0
  %346 = vmatprep.mubr.bf16.mxu0 0
  %347 = vmatmul.mubr.bf16.gmra.mxu0 %v312
  %v348 = vpop.f32.mrf.mxu0
  %v349 = vadd.f32 %v297, %v348
  %v350 = vpop.f32.mrf.mxu0
  %v351 = vpop.f32.mrf.mxu0
  %v352 = vpop.f32.mrf.mxu0
  %353 = vdwg.mxu0
  %v354 = vld [vmem:[%s11] sm:$0x1]
  %v356 = vlaneseq
  %v357 = vshrl.u32 %v356, 7
  %v358 = vsub.s32 0, %v357
  %v359 = vrot.slane %v354, %v358
  %v361 = vmax.f32 %v349, %v359
  %v362 = vld [vmem:[%s12] sm:$0x1]
  %v364 = vlaneseq
  %v365 = vshrl.u32 %v364, 7
  %v366 = vsub.s32 0, %v365
  %v367 = vrot.slane %v362, %v366
  %v369 = vmin.f32 %v361, %v367
  %370 = vst [vmem:[%s13] sm:$0xff] %v369
  // Predicated region
  $region54: #{policy_forward.1} parent=0 // pred_check
    _
  $region55: #{policy_forward.1} parent=0 // pred_check_branch
    %372 = sbr.rel (0) target = $region57
  $region56: #{policy_forward.1} parent=0 // pred_region
    _
  $region57: #{policy_forward.1} parent=0 // pred_fallthru
    _
  // Predicated region
  $region58: #{policy_forward.1} parent=0 // pred_check
    _
  $region59: #{policy_forward.1} parent=0 // pred_check_branch
    %374 = sbr.rel (0) target = $region61
  $region60: #{policy_forward.1} parent=0 // pred_region
    _
  $region61: #{policy_forward.1} parent=0 // pred_fallthru
    _

</llo_original>
